<compile_context>
chip_gen: v7x
topology: tpu7x:2x2x1
jax: 0.10.0
libtpu: 0.0.40
codegen_flags: <defaults>
</compile_context>

<pallas_src>
import jax
import jax.numpy as jnp
from jax.experimental import pallas as pl
from jax.experimental.pallas import tpu as pltpu

LANE = 128
SUBLANE = 8


def _round_up(x, m):
    return ((x + m - 1) // m) * m


def _pad2d(x, rows, cols):
    out = jnp.zeros((rows, cols), x.dtype)
    return out.at[: x.shape[0], : x.shape[1]].set(x)


def _q_kernel(x_ref, scale_ref, shift_ref,
              w1_ref, b1_ref, w2_ref, b2_ref, wh_ref, bh_ref,
              out_ref):
    # Folded double normalization: one affine on the raw [s | a] tile.
    x = x_ref[...] * scale_ref[...] + shift_ref[...]
    # fc1 + relu
    h1 = jnp.dot(x, w1_ref[...], preferred_element_type=jnp.float32) + b1_ref[...]
    h1 = jnp.maximum(h1, 0.0)
    # fc2 + relu
    h2 = jnp.dot(h1, w2_ref[...], preferred_element_type=jnp.float32) + b2_ref[...]
    h2 = jnp.maximum(h2, 0.0)
    # Fused heads: one lane-dense matmul -> [q | model_output | zero-pad]
    out = jnp.dot(h2, wh_ref[...], preferred_element_type=jnp.float32) + bh_ref[...]
    out_ref[...] = out.astype(out_ref.dtype)


def init_params(key, state_dim, action_dim, hidden_dim):
    """xavier_uniform (gain=1) weights stored as (in, out), zero biases — matches weights_init_."""
    def xavier(k, fan_in, fan_out):
        bound = jnp.sqrt(6.0 / (fan_in + fan_out))
        return jax.random.uniform(k, (fan_in, fan_out), jnp.float32, -bound, bound)

    k1, k2, k3, k4 = jax.random.split(key, 4)
    in_dim = state_dim + action_dim
    return {
        "w1": xavier(k1, in_dim, hidden_dim),
        "b1": jnp.zeros((hidden_dim,), jnp.float32),
        "w2": xavier(k2, hidden_dim, hidden_dim),
        "b2": jnp.zeros((hidden_dim,), jnp.float32),
        "w3": xavier(k3, hidden_dim, 1),          # fc3  -> q value
        "b3": jnp.zeros((1,), jnp.float32),
        "wm": xavier(k4, hidden_dim, state_dim),  # fc_model -> next-state model
        "bm": jnp.zeros((state_dim,), jnp.float32),
    }


def prepare_q(params, xmean, xstd, state_dim, action_dim, weight_dtype=jnp.float32):
    """Pad/fuse parameters once (outside the hot path)."""
    in_dim = state_dim + action_dim
    hidden_dim = params["w1"].shape[1]
    in_pad = _round_up(in_dim, LANE)
    h_pad = _round_up(hidden_dim, LANE)
    out_dim = 1 + state_dim
    out_pad = _round_up(out_dim, LANE)

    m = xmean[:in_dim].astype(jnp.float32)
    sd = xstd[:in_dim].astype(jnp.float32)
    m_s, m_a = m[:state_dim], m[state_dim:]
    s_s, s_a = sd[:state_dim], sd[state_dim:]
    # state columns are normalized twice in the reference forward; action columns once.
    scale = jnp.concatenate([1.0 / (s_s * s_s), 1.0 / s_a])
    shift = jnp.concatenate([-m_s / (s_s * s_s) - m_s / s_s, -m_a / s_a])

    wh = jnp.concatenate([params["w3"], params["wm"]], axis=1)   # (H, 1 + state_dim)
    bh = jnp.concatenate([params["b3"], params["bm"]], axis=0)

    return {
        "scale": _pad2d(scale[None, :], 1, in_pad),
        "shift": _pad2d(shift[None, :], 1, in_pad),
        "w1": _pad2d(params["w1"], in_pad, h_pad).astype(weight_dtype),
        "b1": _pad2d(params["b1"][None, :], 1, h_pad),
        "w2": _pad2d(params["w2"], h_pad, h_pad).astype(weight_dtype),
        "b2": _pad2d(params["b2"][None, :], 1, h_pad),
        "wh": _pad2d(wh, h_pad, out_pad).astype(weight_dtype),
        "bh": _pad2d(bh[None, :], 1, out_pad),
        "dims": (state_dim, action_dim, in_pad, h_pad, out_pad),
    }


def q_forward(s, a, prep, *, is_discrete=False, block_b=512):
    """Fused forward: returns (q, model_output) matching Q.forward(s, a)."""
    state_dim, action_dim, in_pad, h_pad, out_pad = prep["dims"]
    if is_discrete:
        # one-hot encode discrete actions (done in the JAX wrapper, not the kernel)
        a = jax.nn.one_hot(a.astype(jnp.int32), action_dim, dtype=jnp.float32)
    x = jnp.concatenate([s.astype(jnp.float32), a.astype(jnp.float32)], axis=-1)

    B = x.shape[0]
    b_pad = _round_up(B, SUBLANE)
    tb = min(b_pad, block_b)          # big batch -> 512-row tiles; tiny batch -> 1 grid step
    b_pad = _round_up(b_pad, tb)
    x = _pad2d(x, b_pad, in_pad)

    const = lambda i: (0, 0)          # weights/biases resident in VMEM across grid steps
    out = pl.pallas_call(
        _q_kernel,
        out_shape=jax.ShapeDtypeStruct((b_pad, out_pad), jnp.float32),
        grid=(b_pad // tb,),
        in_specs=[
            pl.BlockSpec((tb, in_pad), lambda i: (i, 0)),   # x tile (double-buffered)
            pl.BlockSpec((1, in_pad), const),               # scale
            pl.BlockSpec((1, in_pad), const),               # shift
            pl.BlockSpec((in_pad, h_pad), const),           # w1
            pl.BlockSpec((1, h_pad), const),                # b1
            pl.BlockSpec((h_pad, h_pad), const),            # w2
            pl.BlockSpec((1, h_pad), const),                # b2
            pl.BlockSpec((h_pad, out_pad), const),          # fused head weight
            pl.BlockSpec((1, out_pad), const),              # fused head bias
        ],
        out_specs=pl.BlockSpec((tb, out_pad), lambda i: (i, 0)),
        compiler_params=pltpu.CompilerParams(
            dimension_semantics=("parallel",)),
    )(x, prep["scale"], prep["shift"], prep["w1"], prep["b1"],
      prep["w2"], prep["b2"], prep["wh"], prep["bh"])

    q = out[:B, 0:1]
    model_output = out[:B, 1:1 + state_dim]
    return q, model_output


def reference_forward(s, a, params, xmean, xstd, state_dim, action_dim, is_discrete=False):
    """Pure-JAX replica of the PyTorch forward (two-stage normalization, separate heads)."""
    m = xmean.astype(jnp.float32)
    sd = xstd.astype(jnp.float32)
    s_n = (s - m[:state_dim]) / sd[:state_dim]
    if is_discrete:
        a = jax.nn.one_hot(a.astype(jnp.int32), action_dim, dtype=jnp.float32)
    x = jnp.concatenate([s_n, a], axis=-1)
    x = (x - m[:state_dim + action_dim]) / sd[:state_dim + action_dim]
    h1 = jnp.maximum(x @ params["w1"] + params["b1"], 0.0)
    h2 = jnp.maximum(h1 @ params["w2"] + params["b2"], 0.0)
    q = h2 @ params["w3"] + params["b3"]
    mo = h2 @ params["wm"] + params["bm"]
    return q, mo


if __name__ == "__main__":
    # Small shapes consistent with the module: batch=2, state_dim=8, action_dim=4, hidden=32.
    B, state_dim, action_dim, hidden_dim = 2, 8, 4, 32

    key = jax.random.PRNGKey(0)
    kp, ks, ka, km, kv = jax.random.split(key, 5)
    params = init_params(kp, state_dim, action_dim, hidden_dim)
    s = jax.random.normal(ks, (B, state_dim), jnp.float32)
    a = jax.random.normal(ka, (B, action_dim), jnp.float32)
    xmean = jax.random.normal(km, (state_dim + action_dim,), jnp.float32) * 0.1
    xstd = jnp.abs(jax.random.normal(kv, (state_dim + action_dim,), jnp.float32)) + 0.5

    prep = prepare_q(params, xmean, xstd, state_dim, action_dim)  # weight_dtype=jnp.bfloat16 for large nets
    q, model_output = q_forward(s, a, prep)
    jax.block_until_ready((q, model_output))

    q_ref, mo_ref = reference_forward(s, a, params, xmean, xstd, state_dim, action_dim)
    assert q.shape == (B, 1) and model_output.shape == (B, state_dim)
    assert jnp.allclose(q, q_ref, atol=1e-4, rtol=1e-4), "q mismatch"
    assert jnp.allclose(model_output, mo_ref, atol=1e-4, rtol=1e-4), "model_output mismatch"

    # TODO(synk): only the forward pass is implemented; optimizer / distribution
    # utilities from the original file are out of scope for a kernel.
    print("KERNEL_OK")
</pallas_src>

<mosaic_0001>
module attributes {stable_mosaic.version = 11 : i64} {
  func.func @_q_kernel(%arg0: i32, %arg1: memref<8x128xf32, #tpu.memory_space<vmem>>, %arg2: memref<1x128xf32, #tpu.memory_space<vmem>>, %arg3: memref<1x128xf32, #tpu.memory_space<vmem>>, %arg4: memref<128x128xf32, #tpu.memory_space<vmem>>, %arg5: memref<1x128xf32, #tpu.memory_space<vmem>>, %arg6: memref<128x128xf32, #tpu.memory_space<vmem>>, %arg7: memref<1x128xf32, #tpu.memory_space<vmem>>, %arg8: memref<128x128xf32, #tpu.memory_space<vmem>>, %arg9: memref<1x128xf32, #tpu.memory_space<vmem>>, %arg10: memref<8x128xf32, #tpu.memory_space<vmem>>) attributes {dimension_semantics = [#tpu.dimension_semantics<parallel>], iteration_bounds = array<i64: 1>, scalar_prefetch = 0 : i64, scratch_operands = 0 : i64, tpu.core_type = #tpu.core_type<tc>, window_params = [{transform_indices = @transform_0, window_bounds = array<i64: 8, 128>}, {pipeline_mode = #tpu.pipeline_mode<synchronous>, transform_indices = @transform_1, window_bounds = array<i64: 1, 128>}, {pipeline_mode = #tpu.pipeline_mode<synchronous>, transform_indices = @transform_2, window_bounds = array<i64: 1, 128>}, {pipeline_mode = #tpu.pipeline_mode<synchronous>, transform_indices = @transform_3, window_bounds = array<i64: 128, 128>}, {pipeline_mode = #tpu.pipeline_mode<synchronous>, transform_indices = @transform_4, window_bounds = array<i64: 1, 128>}, {pipeline_mode = #tpu.pipeline_mode<synchronous>, transform_indices = @transform_5, window_bounds = array<i64: 128, 128>}, {pipeline_mode = #tpu.pipeline_mode<synchronous>, transform_indices = @transform_6, window_bounds = array<i64: 1, 128>}, {pipeline_mode = #tpu.pipeline_mode<synchronous>, transform_indices = @transform_7, window_bounds = array<i64: 128, 128>}, {pipeline_mode = #tpu.pipeline_mode<synchronous>, transform_indices = @transform_8, window_bounds = array<i64: 1, 128>}, {transform_indices = @transform_9, window_bounds = array<i64: 8, 128>}]} {
    %c0 = arith.constant 0 : index
    %c0_0 = arith.constant 0 : index
    %0 = vector.load %arg1[%c0, %c0_0] : memref<8x128xf32, #tpu.memory_space<vmem>>, vector<8x128xf32>
    %c0_1 = arith.constant 0 : index
    %c0_2 = arith.constant 0 : index
    %1 = vector.load %arg2[%c0_1, %c0_2] : memref<1x128xf32, #tpu.memory_space<vmem>>, vector<1x128xf32>
    %2 = vector.broadcast %1 : vector<1x128xf32> to vector<8x128xf32>
    %3 = arith.mulf %0, %2 : vector<8x128xf32>
    %c0_3 = arith.constant 0 : index
    %c0_4 = arith.constant 0 : index
    %4 = vector.load %arg3[%c0_3, %c0_4] : memref<1x128xf32, #tpu.memory_space<vmem>>, vector<1x128xf32>
    %5 = vector.broadcast %4 : vector<1x128xf32> to vector<8x128xf32>
    %6 = arith.addf %3, %5 : vector<8x128xf32>
    %c0_5 = arith.constant 0 : index
    %c0_6 = arith.constant 0 : index
    %7 = vector.load %arg4[%c0_5, %c0_6] : memref<128x128xf32, #tpu.memory_space<vmem>>, vector<128x128xf32>
    %cst = arith.constant dense<0.000000e+00> : vector<8x128xf32>
    %8 = tpu.matmul %6, %7, %cst {dimension_numbers = #tpu.dot_dimension_numbers<[1], [0], [0], [1], [0, 0, 1, 1], [], []>} : vector<8x128xf32>, vector<128x128xf32>, vector<8x128xf32> -> vector<8x128xf32>
    %c0_7 = arith.constant 0 : index
    %c0_8 = arith.constant 0 : index
    %9 = vector.load %arg5[%c0_7, %c0_8] : memref<1x128xf32, #tpu.memory_space<vmem>>, vector<1x128xf32>
    %10 = vector.broadcast %9 : vector<1x128xf32> to vector<8x128xf32>
    %11 = arith.addf %8, %10 : vector<8x128xf32>
    %cst_9 = arith.constant 0.000000e+00 : f32
    %12 = vector.broadcast %cst_9 : f32 to vector<8x128xf32>
    %13 = arith.maximumf %11, %12 : vector<8x128xf32>
    %c0_10 = arith.constant 0 : index
    %c0_11 = arith.constant 0 : index
    %14 = vector.load %arg6[%c0_10, %c0_11] : memref<128x128xf32, #tpu.memory_space<vmem>>, vector<128x128xf32>
    %cst_12 = arith.constant dense<0.000000e+00> : vector<8x128xf32>
    %15 = tpu.matmul %13, %14, %cst_12 {dimension_numbers = #tpu.dot_dimension_numbers<[1], [0], [0], [1], [0, 0, 1, 1], [], []>} : vector<8x128xf32>, vector<128x128xf32>, vector<8x128xf32> -> vector<8x128xf32>
    %c0_13 = arith.constant 0 : index
    %c0_14 = arith.constant 0 : index
    %16 = vector.load %arg7[%c0_13, %c0_14] : memref<1x128xf32, #tpu.memory_space<vmem>>, vector<1x128xf32>
    %17 = vector.broadcast %16 : vector<1x128xf32> to vector<8x128xf32>
    %18 = arith.addf %15, %17 : vector<8x128xf32>
    %cst_15 = arith.constant 0.000000e+00 : f32
    %19 = vector.broadcast %cst_15 : f32 to vector<8x128xf32>
    %20 = arith.maximumf %18, %19 : vector<8x128xf32>
    %c0_16 = arith.constant 0 : index
    %c0_17 = arith.constant 0 : index
    %21 = vector.load %arg8[%c0_16, %c0_17] : memref<128x128xf32, #tpu.memory_space<vmem>>, vector<128x128xf32>
    %cst_18 = arith.constant dense<0.000000e+00> : vector<8x128xf32>
    %22 = tpu.matmul %20, %21, %cst_18 {dimension_numbers = #tpu.dot_dimension_numbers<[1], [0], [0], [1], [0, 0, 1, 1], [], []>} : vector<8x128xf32>, vector<128x128xf32>, vector<8x128xf32> -> vector<8x128xf32>
    %c0_19 = arith.constant 0 : index
    %c0_20 = arith.constant 0 : index
    %23 = vector.load %arg9[%c0_19, %c0_20] : memref<1x128xf32, #tpu.memory_space<vmem>>, vector<1x128xf32>
    %24 = vector.broadcast %23 : vector<1x128xf32> to vector<8x128xf32>
    %25 = arith.addf %22, %24 : vector<8x128xf32>
    %c0_21 = arith.constant 0 : index
    %c0_22 = arith.constant 0 : index
    %26 = vector.load %arg10[%c0_21, %c0_22] : memref<8x128xf32, #tpu.memory_space<vmem>>, vector<8x128xf32>
    tpu.vector_store %arg10[%c0_21, %c0_22], %25 {strides = array<i32>} : memref<8x128xf32, #tpu.memory_space<vmem>>, vector<8x128xf32>,
    return
  }
  func.func @transform_0(%arg0: i32) -> (i32, i32) {
    %c0_i32 = arith.constant 0 : i32
    %c0_i32_0 = arith.constant 0 : i32
    return %arg0, %c0_i32 : i32, i32
  }
  func.func @transform_1(%arg0: i32) -> (i32, i32) {
    %c0_i32 = arith.constant 0 : i32
    %c0_i32_0 = arith.constant 0 : i32
    %c0_i32_1 = arith.constant 0 : i32
    return %c0_i32, %c0_i32_0 : i32, i32
  }
  func.func @transform_2(%arg0: i32) -> (i32, i32) {
    %c0_i32 = arith.constant 0 : i32
    %c0_i32_0 = arith.constant 0 : i32
    %c0_i32_1 = arith.constant 0 : i32
    return %c0_i32, %c0_i32_0 : i32, i32
  }
  func.func @transform_3(%arg0: i32) -> (i32, i32) {
    %c0_i32 = arith.constant 0 : i32
    %c0_i32_0 = arith.constant 0 : i32
    %c0_i32_1 = arith.constant 0 : i32
    return %c0_i32, %c0_i32_0 : i32, i32
  }
  func.func @transform_4(%arg0: i32) -> (i32, i32) {
    %c0_i32 = arith.constant 0 : i32
    %c0_i32_0 = arith.constant 0 : i32
    %c0_i32_1 = arith.constant 0 : i32
    return %c0_i32, %c0_i32_0 : i32, i32
  }
  func.func @transform_5(%arg0: i32) -> (i32, i32) {
    %c0_i32 = arith.constant 0 : i32
    %c0_i32_0 = arith.constant 0 : i32
    %c0_i32_1 = arith.constant 0 : i32
    return %c0_i32, %c0_i32_0 : i32, i32
  }
  func.func @transform_6(%arg0: i32) -> (i32, i32) {
    %c0_i32 = arith.constant 0 : i32
    %c0_i32_0 = arith.constant 0 : i32
    %c0_i32_1 = arith.constant 0 : i32
    return %c0_i32, %c0_i32_0 : i32, i32
  }
  func.func @transform_7(%arg0: i32) -> (i32, i32) {
    %c0_i32 = arith.constant 0 : i32
    %c0_i32_0 = arith.constant 0 : i32
    %c0_i32_1 = arith.constant 0 : i32
    return %c0_i32, %c0_i32_0 : i32, i32
  }
  func.func @transform_8(%arg0: i32) -> (i32, i32) {
    %c0_i32 = arith.constant 0 : i32
    %c0_i32_0 = arith.constant 0 : i32
    %c0_i32_1 = arith.constant 0 : i32
    return %c0_i32, %c0_i32_0 : i32, i32
  }
  func.func @transform_9(%arg0: i32) -> (i32, i32) {
    %c0_i32 = arith.constant 0 : i32
    %c0_i32_0 = arith.constant 0 : i32
    return %arg0, %c0_i32 : i32, i32
  }
}

</mosaic_0001>

<llo_original>
// kernel: tpu_custom_call.1
$region0: #{tpu_custom_call.1}
  #allocation0 [shape = 'u32[]', space=smem, size = 0x4, offset = 0x4, fixed_abs, tag = 'smem constant byte address 0x4 - core index']
  #allocation1 [shape = 'u32[144,128]{1,0:T(1,128)}', space=vmem, size = 0x12000, scoped, tag = 'internal scratch']
  %s0 = inlined_call_operand.hbm [shape: f32[8,128], index: 0, kind: input, shape index: {}]
  %s1 = inlined_call_operand.vmem [shape: f32[1,128], index: 1, kind: input, shape index: {}]
  %s2 = inlined_call_operand.vmem [shape: f32[1,128], index: 2, kind: input, shape index: {}]
  %s3 = inlined_call_operand.hbm [shape: f32[128,128], index: 3, kind: input, shape index: {}]
  %s4 = inlined_call_operand.vmem [shape: f32[1,128], index: 4, kind: input, shape index: {}]
  %s5 = inlined_call_operand.hbm [shape: f32[128,128], index: 5, kind: input, shape index: {}]
  %s6 = inlined_call_operand.vmem [shape: f32[1,128], index: 6, kind: input, shape index: {}]
  %s7 = inlined_call_operand.hbm [shape: f32[128,128], index: 7, kind: input, shape index: {}]
  %s8 = inlined_call_operand.vmem [shape: f32[1,128], index: 8, kind: input, shape index: {}]
  %s9 = inlined_call_operand.hbm [shape: f32[8,128], index: 9, kind: output, shape index: {}]
  %s10 = sld [smem:[#allocation0]]
  $region62: #{tpu_custom_call.1} parent=0
    _
  %s12 = ssub.s32 1, %s10
  %s13 = scalar_select 0, %s12, %s10
  $region1: #{tpu_custom_call.1} parent=0
    #allocation2 [shape = 'u8[4096]{0}', space=vmem, size = 0x1000, scoped, tag = 'input window, operand 0, single buffered']
    #allocation3 [shape = 's32[1]{0}', space=sflag, size = 0x4, scoped, tag = 'scoped memory for tpu_custom_call.1']
    #allocation4 [shape = 's32[1]{0}', space=sflag, size = 0x4, scoped, tag = 'scoped memory for tpu_custom_call.1']
    #allocation5 [shape = 'u8[65536]{0}', space=vmem, size = 0x10000, scoped, tag = 'input window, operand 3, single buffered']
    #allocation6 [shape = 's32[1]{0}', space=sflag, size = 0x4, scoped, tag = 'scoped memory for tpu_custom_call.1']
    #allocation7 [shape = 'u8[65536]{0}', space=vmem, size = 0x10000, scoped, tag = 'input window, operand 5, single buffered']
    #allocation8 [shape = 'u8[65536]{0}', space=vmem, size = 0x10000, scoped, tag = 'input window, operand 7, single buffered']
    #allocation9 [shape = 's32[1]{0}', space=sflag, size = 0x4, scoped, tag = 'scoped memory for tpu_custom_call.1']
    #allocation10 [shape = 'u8[4096]{0}', space=vmem, size = 0x1000, scoped, tag = 'output window, operand 0, single buffered']
    %14 = vsyncpa [#allocation3], 0
    %15 = vsyncpa [#allocation6], 0
    %16 = vsyncpa [#allocation9], 0
    %17 = vsyncpa [#allocation4], 0
    // Predicated region
    $region2: #{tpu_custom_call.1} parent=1 // pred_check
      _
    $region3: #{tpu_custom_call.1} parent=1 // pred_check_branch
      %19 = sbr.rel (0) target = $region5
    $region4: #{tpu_custom_call.1} parent=1 // pred_region
      %s21 = ssub.s32 128, 128
      %22 = vsyncadd [#allocation3], %s21
      %s24 = sshll.u32 [#allocation2], 4
      %s25 = int_to_ptr.vmem [resolvable:$true] %s24
      %27 = dma.hbm_to_vmem [thread:$0]  %s0, 128, %s25, [#allocation3]
    $region5: #{tpu_custom_call.1} parent=1 // pred_fallthru
      _
    // Predicated region
    $region6: #{tpu_custom_call.1} parent=1 // pred_check
      _
    $region7: #{tpu_custom_call.1} parent=1 // pred_check_branch
      %29 = sbr.rel (0) target = $region9
    $region8: #{tpu_custom_call.1} parent=1 // pred_region
      _
    $region9: #{tpu_custom_call.1} parent=1 // pred_fallthru
      _
    // Predicated region
    $region10: #{tpu_custom_call.1} parent=1 // pred_check
      _
    $region11: #{tpu_custom_call.1} parent=1 // pred_check_branch
      %31 = sbr.rel (0) target = $region13
    $region12: #{tpu_custom_call.1} parent=1 // pred_region
      _
    $region13: #{tpu_custom_call.1} parent=1 // pred_fallthru
      _
    // Predicated region
    $region14: #{tpu_custom_call.1} parent=1 // pred_check
      _
    $region15: #{tpu_custom_call.1} parent=1 // pred_check_branch
      %33 = sbr.rel (0) target = $region17
    $region16: #{tpu_custom_call.1} parent=1 // pred_region
      %s35 = ssub.s32 2048, 2048
      %36 = vsyncadd [#allocation6], %s35
      %s37 = sshll.u32 [#allocation5], 4
      %s38 = int_to_ptr.vmem [resolvable:$true] %s37
      %43 = dma.hbm_to_vmem [thread:$0]  %s3, 2048, %s38, [#allocation6], 128, 128, 8
    $region17: #{tpu_custom_call.1} parent=1 // pred_fallthru
      _
    // Predicated region
    $region18: #{tpu_custom_call.1} parent=1 // pred_check
      _
    $region19: #{tpu_custom_call.1} parent=1 // pred_check_branch
      %45 = sbr.rel (0) target = $region21
    $region20: #{tpu_custom_call.1} parent=1 // pred_region
      _
    $region21: #{tpu_custom_call.1} parent=1 // pred_fallthru
      _
    // Predicated region
    $region22: #{tpu_custom_call.1} parent=1 // pred_check
      _
    $region23: #{tpu_custom_call.1} parent=1 // pred_check_branch
      %47 = sbr.rel (0) target = $region25
    $region24: #{tpu_custom_call.1} parent=1 // pred_region
      %s49 = ssub.s32 2048, 2048
      %50 = vsyncadd [#allocation6], %s49
      %s51 = sshll.u32 [#allocation7], 4
      %s52 = int_to_ptr.vmem [resolvable:$true] %s51
      %57 = dma.hbm_to_vmem [thread:$0]  %s5, 2048, %s52, [#allocation6], 128, 128, 8
    $region25: #{tpu_custom_call.1} parent=1 // pred_fallthru
      _
    // Predicated region
    $region26: #{tpu_custom_call.1} parent=1 // pred_check
      _
    $region27: #{tpu_custom_call.1} parent=1 // pred_check_branch
      %59 = sbr.rel (0) target = $region29
    $region28: #{tpu_custom_call.1} parent=1 // pred_region
      _
    $region29: #{tpu_custom_call.1} parent=1 // pred_fallthru
      _
    // Predicated region
    $region30: #{tpu_custom_call.1} parent=1 // pred_check
      _
    $region31: #{tpu_custom_call.1} parent=1 // pred_check_branch
      %61 = sbr.rel (0) target = $region33
    $region32: #{tpu_custom_call.1} parent=1 // pred_region
      %s63 = ssub.s32 2048, 2048
      %64 = vsyncadd [#allocation9], %s63
      %s65 = sshll.u32 [#allocation8], 4
      %s66 = int_to_ptr.vmem [resolvable:$true] %s65
      %71 = dma.hbm_to_vmem [thread:$0]  %s7, 2048, %s66, [#allocation9], 128, 128, 8
    $region33: #{tpu_custom_call.1} parent=1 // pred_fallthru
      _
    // Predicated region
    $region34: #{tpu_custom_call.1} parent=1 // pred_check
      _
    $region35: #{tpu_custom_call.1} parent=1 // pred_check_branch
      %73 = sbr.rel (0) target = $region37
    $region36: #{tpu_custom_call.1} parent=1 // pred_region
      _
    $region37: #{tpu_custom_call.1} parent=1 // pred_fallthru
      _
    // Predicated region
    $region38: #{tpu_custom_call.1} parent=1 // pred_check
      _
    $region39: #{tpu_custom_call.1} parent=1 // pred_check_branch
      %75 = sbr.rel (0) target = $region41
    $region40: #{tpu_custom_call.1} parent=1 // pred_region
      %76 = dma.done [#allocation3], 128
    $region41: #{tpu_custom_call.1} parent=1 // pred_fallthru
      _
    // Predicated region
    $region42: #{tpu_custom_call.1} parent=1 // pred_check
      _
    $region43: #{tpu_custom_call.1} parent=1 // pred_check_branch
      %78 = sbr.rel (0) target = $region45
    $region44: #{tpu_custom_call.1} parent=1 // pred_region
      %79 = dma.done [#allocation6], 2048
    $region45: #{tpu_custom_call.1} parent=1 // pred_fallthru
      _
    // Predicated region
    $region46: #{tpu_custom_call.1} parent=1 // pred_check
      _
    $region47: #{tpu_custom_call.1} parent=1 // pred_check_branch
      %81 = sbr.rel (0) target = $region49
    $region48: #{tpu_custom_call.1} parent=1 // pred_region
      %82 = dma.done [#allocation6], 2048
    $region49: #{tpu_custom_call.1} parent=1 // pred_fallthru
      _
    // Predicated region
    $region50: #{tpu_custom_call.1} parent=1 // pred_check
      _
    $region51: #{tpu_custom_call.1} parent=1 // pred_check_branch
      %84 = sbr.rel (0) target = $region53
    $region52: #{tpu_custom_call.1} parent=1 // pred_region
      %85 = dma.done [#allocation9], 2048
    $region53: #{tpu_custom_call.1} parent=1 // pred_fallthru
      _
    %v86 = vld [vmem:[#allocation2] sm:$0xff]
    %v87 = vld [vmem:[%s1] sm:$0x1]
    %v89 = vlaneseq
    %v90 = vshrl.u32 %v89, 7
    %v91 = vsub.s32 0, %v90
    %v92 = vrot.slane %v87, %v91
    %v94 = vmul.f32 %v86, %v92
    %v95 = vld [vmem:[%s2] sm:$0x1]
    %v97 = vlaneseq
    %v98 = vshrl.u32 %v97, 7
    %v99 = vsub.s32 0, %v98
    %v100 = vrot.slane %v95, %v99
    %v102 = vadd.f32 %v94, %v100
    %v103 = vld [vmem:[#allocation5] sm:$0xff]
    %v104 = vld [vmem:[#allocation5 + $0x8] sm:$0xff]
    %v105 = vld [vmem:[#allocation5 + $0x10] sm:$0xff]
    %v106 = vld [vmem:[#allocation5 + $0x18] sm:$0xff]
    %v107 = vld [vmem:[#allocation5 + $0x20] sm:$0xff]
    %v108 = vld [vmem:[#allocation5 + $0x28] sm:$0xff]
    %v109 = vld [vmem:[#allocation5 + $0x30] sm:$0xff]
    %v110 = vld [vmem:[#allocation5 + $0x38] sm:$0xff]
    %v111 = vld [vmem:[#allocation5 + $0x40] sm:$0xff]
    %v112 = vld [vmem:[#allocation5 + $0x48] sm:$0xff]
    %v113 = vld [vmem:[#allocation5 + $0x50] sm:$0xff]
    %v114 = vld [vmem:[#allocation5 + $0x58] sm:$0xff]
    %v115 = vld [vmem:[#allocation5 + $0x60] sm:$0xff]
    %v116 = vld [vmem:[#allocation5 + $0x68] sm:$0xff]
    %v117 = vld [vmem:[#allocation5 + $0x70] sm:$0xff]
    %v118 = vld [vmem:[#allocation5 + $0x78] sm:$0xff]
    %v119 = vld [vmem:[%s4] sm:$0x1]
    %v121 = vlaneseq
    %v122 = vshrl.u32 %v121, 7
    %v123 = vsub.s32 0, %v122
    %v124 = vrot.slane %v119, %v123
    %126 = vmatprep.subr.mxu0 0.0
    %127 = vmatpush1.msra.mxu0 %v103
    %128 = vmatprep.subr.mxu0 0.0
    %129 = vmatpush1.msra.mxu0 %v104
    %130 = vmatprep.subr.mxu0 0.0
    %131 = vmatpush1.msra.mxu0 %v105
    %132 = vmatprep.subr.mxu0 0.0
    %133 = vmatpush1.msra.mxu0 %v106
    %134 = vmatprep.subr.mxu0 0.0
    %135 = vmatpush1.msra.mxu0 %v107
    %136 = vmatprep.subr.mxu0 0.0
    %137 = vmatpush1.msra.mxu0 %v108
    %138 = vmatprep.subr.mxu0 0.0
    %139 = vmatpush1.msra.mxu0 %v109
    %140 = vmatprep.subr.mxu0 0.0
    %141 = vmatpush1.msra.mxu0 %v110
    %142 = vmatprep.subr.mxu0 0.0
    %143 = vmatpush1.msra.mxu0 %v111
    %144 = vmatprep.subr.mxu0 0.0
    %145 = vmatpush1.msra.mxu0 %v112
    %146 = vmatprep.subr.mxu0 0.0
    %147 = vmatpush1.msra.mxu0 %v113
    %148 = vmatprep.subr.mxu0 0.0
    %149 = vmatpush1.msra.mxu0 %v114
    %150 = vmatprep.subr.mxu0 0.0
    %151 = vmatpush1.msra.mxu0 %v115
    %152 = vmatprep.subr.mxu0 0.0
    %153 = vmatpush1.msra.mxu0 %v116
    %154 = vmatprep.subr.mxu0 0.0
    %155 = vmatpush1.msra.mxu0 %v117
    %156 = vmatprep.subr.mxu0 0.0
    %157 = vmatpush1.msra.mxu0 %v118
    %158 = vmatprep.subr.mxu0 0.0
    %159 = vmatpush1.msra.mxu0 0.0
    %160 = vmatprep.subr.mxu0 0.0
    %161 = vmatpush1.msra.mxu0 0.0
    %162 = vmatprep.subr.mxu0 0.0
    %163 = vmatpush1.msra.mxu0 0.0
    %164 = vmatprep.subr.mxu0 0.0
    %165 = vmatpush1.msra.mxu0 0.0
    %166 = vmatprep.subr.mxu0 0.0
    %167 = vmatpush1.msra.mxu0 0.0
    %168 = vmatprep.subr.mxu0 0.0
    %169 = vmatpush1.msra.mxu0 0.0
    %170 = vmatprep.subr.mxu0 0.0
    %171 = vmatpush1.msra.mxu0 0.0
    %172 = vmatprep.subr.mxu0 0.0
    %173 = vmatpush1.msra.mxu0 0.0
    %174 = vmatprep.subr.mxu0 0.0
    %175 = vmatpush1.msra.mxu0 0.0
    %176 = vmatprep.subr.mxu0 0.0
    %177 = vmatpush1.msra.mxu0 0.0
    %178 = vmatprep.subr.mxu0 0.0
    %179 = vmatpush1.msra.mxu0 0.0
    %180 = vmatprep.subr.mxu0 0.0
    %181 = vmatpush1.msra.mxu0 0.0
    %182 = vmatprep.subr.mxu0 0.0
    %183 = vmatpush1.msra.mxu0 0.0
    %184 = vmatprep.subr.mxu0 0.0
    %185 = vmatpush1.msra.mxu0 0.0
    %186 = vmatprep.subr.mxu0 0.0
    %187 = vmatpush1.msra.mxu0 0.0
    %188 = vmatprep.subr.mxu0 0.0
    %189 = vmatpush1.msra.mxu0 0.0
    %190 = vmatprep.mubr.f32.mxu0 0.0
    %191 = vmatmul.mubr.f32.gmra.mrb[0].mxu0 %v102
    %v192 = vpop.f32.mrb[0].mxu0
    %v193 = vadd.f32 %v124, %v192
    %v194 = vpop.f32.mrb[0].mxu0
    %195 = vdwg.mxu0
    %v196 = vmax.f32 %v193, 0.0
    %v197 = vld [vmem:[#allocation7] sm:$0xff]
    %v198 = vld [vmem:[#allocation7 + $0x8] sm:$0xff]
    %v199 = vld [vmem:[#allocation7 + $0x10] sm:$0xff]
    %v200 = vld [vmem:[#allocation7 + $0x18] sm:$0xff]
    %v201 = vld [vmem:[#allocation7 + $0x20] sm:$0xff]
    %v202 = vld [vmem:[#allocation7 + $0x28] sm:$0xff]
    %v203 = vld [vmem:[#allocation7 + $0x30] sm:$0xff]
    %v204 = vld [vmem:[#allocation7 + $0x38] sm:$0xff]
    %v205 = vld [vmem:[#allocation7 + $0x40] sm:$0xff]
    %v206 = vld [vmem:[#allocation7 + $0x48] sm:$0xff]
    %v207 = vld [vmem:[#allocation7 + $0x50] sm:$0xff]
    %v208 = vld [vmem:[#allocation7 + $0x58] sm:$0xff]
    %v209 = vld [vmem:[#allocation7 + $0x60] sm:$0xff]
    %v210 = vld [vmem:[#allocation7 + $0x68] sm:$0xff]
    %v211 = vld [vmem:[#allocation7 + $0x70] sm:$0xff]
    %v212 = vld [vmem:[#allocation7 + $0x78] sm:$0xff]
    %v213 = vld [vmem:[%s6] sm:$0x1]
    %v215 = vlaneseq
    %v216 = vshrl.u32 %v215, 7
    %v217 = vsub.s32 0, %v216
    %v218 = vrot.slane %v213, %v217
    %220 = vmatprep.subr.mxu0 0.0
    %221 = vmatpush1.msra.mxu0 %v197
    %222 = vmatprep.subr.mxu0 0.0
    %223 = vmatpush1.msra.mxu0 %v198
    %224 = vmatprep.subr.mxu0 0.0
    %225 = vmatpush1.msra.mxu0 %v199
    %226 = vmatprep.subr.mxu0 0.0
    %227 = vmatpush1.msra.mxu0 %v200
    %228 = vmatprep.subr.mxu0 0.0
    %229 = vmatpush1.msra.mxu0 %v201
    %230 = vmatprep.subr.mxu0 0.0
    %231 = vmatpush1.msra.mxu0 %v202
    %232 = vmatprep.subr.mxu0 0.0
    %233 = vmatpush1.msra.mxu0 %v203
    %234 = vmatprep.subr.mxu0 0.0
    %235 = vmatpush1.msra.mxu0 %v204
    %236 = vmatprep.subr.mxu0 0.0
    %237 = vmatpush1.msra.mxu0 %v205
    %238 = vmatprep.subr.mxu0 0.0
    %239 = vmatpush1.msra.mxu0 %v206
    %240 = vmatprep.subr.mxu0 0.0
    %241 = vmatpush1.msra.mxu0 %v207
    %242 = vmatprep.subr.mxu0 0.0
    %243 = vmatpush1.msra.mxu0 %v208
    %244 = vmatprep.subr.mxu0 0.0
    %245 = vmatpush1.msra.mxu0 %v209
    %246 = vmatprep.subr.mxu0 0.0
    %247 = vmatpush1.msra.mxu0 %v210
    %248 = vmatprep.subr.mxu0 0.0
    %249 = vmatpush1.msra.mxu0 %v211
    %250 = vmatprep.subr.mxu0 0.0
    %251 = vmatpush1.msra.mxu0 %v212
    %252 = vmatprep.subr.mxu0 0.0
    %253 = vmatpush1.msra.mxu0 0.0
    %254 = vmatprep.subr.mxu0 0.0
    %255 = vmatpush1.msra.mxu0 0.0
    %256 = vmatprep.subr.mxu0 0.0
    %257 = vmatpush1.msra.mxu0 0.0
    %258 = vmatprep.subr.mxu0 0.0
    %259 = vmatpush1.msra.mxu0 0.0
    %260 = vmatprep.subr.mxu0 0.0
    %261 = vmatpush1.msra.mxu0 0.0
    %262 = vmatprep.subr.mxu0 0.0
    %263 = vmatpush1.msra.mxu0 0.0
    %264 = vmatprep.subr.mxu0 0.0
    %265 = vmatpush1.msra.mxu0 0.0
    %266 = vmatprep.subr.mxu0 0.0
    %267 = vmatpush1.msra.mxu0 0.0
    %268 = vmatprep.subr.mxu0 0.0
    %269 = vmatpush1.msra.mxu0 0.0
    %270 = vmatprep.subr.mxu0 0.0
    %271 = vmatpush1.msra.mxu0 0.0
    %272 = vmatprep.subr.mxu0 0.0
    %273 = vmatpush1.msra.mxu0 0.0
    %274 = vmatprep.subr.mxu0 0.0
    %275 = vmatpush1.msra.mxu0 0.0
    %276 = vmatprep.subr.mxu0 0.0
    %277 = vmatpush1.msra.mxu0 0.0
    %278 = vmatprep.subr.mxu0 0.0
    %279 = vmatpush1.msra.mxu0 0.0
    %280 = vmatprep.subr.mxu0 0.0
    %281 = vmatpush1.msra.mxu0 0.0
    %282 = vmatprep.subr.mxu0 0.0
    %283 = vmatpush1.msra.mxu0 0.0
    %284 = vmatprep.mubr.f32.mxu0 0.0
    %285 = vmatmul.mubr.f32.gmra.mrb[0].mxu0 %v196
    %v286 = vpop.f32.mrb[0].mxu0
    %v287 = vadd.f32 %v218, %v286
    %v288 = vpop.f32.mrb[0].mxu0
    %289 = vdwg.mxu0
    %v290 = vmax.f32 %v287, 0.0
    %v291 = vld [vmem:[#allocation8] sm:$0xff]
    %v292 = vld [vmem:[#allocation8 + $0x8] sm:$0xff]
    %v293 = vld [vmem:[#allocation8 + $0x10] sm:$0xff]
    %v294 = vld [vmem:[#allocation8 + $0x18] sm:$0xff]
    %v295 = vld [vmem:[#allocation8 + $0x20] sm:$0xff]
    %v296 = vld [vmem:[#allocation8 + $0x28] sm:$0xff]
    %v297 = vld [vmem:[#allocation8 + $0x30] sm:$0xff]
    %v298 = vld [vmem:[#allocation8 + $0x38] sm:$0xff]
    %v299 = vld [vmem:[#allocation8 + $0x40] sm:$0xff]
    %v300 = vld [vmem:[#allocation8 + $0x48] sm:$0xff]
    %v301 = vld [vmem:[#allocation8 + $0x50] sm:$0xff]
    %v302 = vld [vmem:[#allocation8 + $0x58] sm:$0xff]
    %v303 = vld [vmem:[#allocation8 + $0x60] sm:$0xff]
    %v304 = vld [vmem:[#allocation8 + $0x68] sm:$0xff]
    %v305 = vld [vmem:[#allocation8 + $0x70] sm:$0xff]
    %v306 = vld [vmem:[#allocation8 + $0x78] sm:$0xff]
    %v307 = vld [vmem:[%s8] sm:$0x1]
    %v309 = vlaneseq
    %v310 = vshrl.u32 %v309, 7
    %v311 = vsub.s32 0, %v310
    %v312 = vrot.slane %v307, %v311
    %314 = vmatprep.subr.mxu0 0.0
    %315 = vmatpush1.msra.mxu0 %v291
    %316 = vmatprep.subr.mxu0 0.0
    %317 = vmatpush1.msra.mxu0 %v292
    %318 = vmatprep.subr.mxu0 0.0
    %319 = vmatpush1.msra.mxu0 %v293
    %320 = vmatprep.subr.mxu0 0.0
    %321 = vmatpush1.msra.mxu0 %v294
    %322 = vmatprep.subr.mxu0 0.0
    %323 = vmatpush1.msra.mxu0 %v295
    %324 = vmatprep.subr.mxu0 0.0
    %325 = vmatpush1.msra.mxu0 %v296
    %326 = vmatprep.subr.mxu0 0.0
    %327 = vmatpush1.msra.mxu0 %v297
    %328 = vmatprep.subr.mxu0 0.0
    %329 = vmatpush1.msra.mxu0 %v298
    %330 = vmatprep.subr.mxu0 0.0
    %331 = vmatpush1.msra.mxu0 %v299
    %332 = vmatprep.subr.mxu0 0.0
    %333 = vmatpush1.msra.mxu0 %v300
    %334 = vmatprep.subr.mxu0 0.0
    %335 = vmatpush1.msra.mxu0 %v301
    %336 = vmatprep.subr.mxu0 0.0
    %337 = vmatpush1.msra.mxu0 %v302
    %338 = vmatprep.subr.mxu0 0.0
    %339 = vmatpush1.msra.mxu0 %v303
    %340 = vmatprep.subr.mxu0 0.0
    %341 = vmatpush1.msra.mxu0 %v304
    %342 = vmatprep.subr.mxu0 0.0
    %343 = vmatpush1.msra.mxu0 %v305
    %344 = vmatprep.subr.mxu0 0.0
    %345 = vmatpush1.msra.mxu0 %v306
    %346 = vmatprep.subr.mxu0 0.0
    %347 = vmatpush1.msra.mxu0 0.0
    %348 = vmatprep.subr.mxu0 0.0
    %349 = vmatpush1.msra.mxu0 0.0
    %350 = vmatprep.subr.mxu0 0.0
    %351 = vmatpush1.msra.mxu0 0.0
    %352 = vmatprep.subr.mxu0 0.0
    %353 = vmatpush1.msra.mxu0 0.0
    %354 = vmatprep.subr.mxu0 0.0
    %355 = vmatpush1.msra.mxu0 0.0
    %356 = vmatprep.subr.mxu0 0.0
    %357 = vmatpush1.msra.mxu0 0.0
    %358 = vmatprep.subr.mxu0 0.0
    %359 = vmatpush1.msra.mxu0 0.0
    %360 = vmatprep.subr.mxu0 0.0
    %361 = vmatpush1.msra.mxu0 0.0
    %362 = vmatprep.subr.mxu0 0.0
    %363 = vmatpush1.msra.mxu0 0.0
    %364 = vmatprep.subr.mxu0 0.0
    %365 = vmatpush1.msra.mxu0 0.0
    %366 = vmatprep.subr.mxu0 0.0
    %367 = vmatpush1.msra.mxu0 0.0
    %368 = vmatprep.subr.mxu0 0.0
    %369 = vmatpush1.msra.mxu0 0.0
    %370 = vmatprep.subr.mxu0 0.0
    %371 = vmatpush1.msra.mxu0 0.0
    %372 = vmatprep.subr.mxu0 0.0
    %373 = vmatpush1.msra.mxu0 0.0
    %374 = vmatprep.subr.mxu0 0.0
    %375 = vmatpush1.msra.mxu0 0.0
    %376 = vmatprep.subr.mxu0 0.0
    %377 = vmatpush1.msra.mxu0 0.0
    %378 = vmatprep.mubr.f32.mxu0 0.0
    %379 = vmatmul.mubr.f32.gmra.mrb[0].mxu0 %v290
    %v380 = vpop.f32.mrb[0].mxu0
    %v381 = vadd.f32 %v312, %v380
    %v382 = vpop.f32.mrb[0].mxu0
    %383 = vdwg.mxu0
    %384 = vst [vmem:[#allocation10] sm:$0xff] %v381
    // Predicated region
    $region54: #{tpu_custom_call.1} parent=1 // pred_check
      _
    $region55: #{tpu_custom_call.1} parent=1 // pred_check_branch
      %386 = sbr.rel (0) target = $region57
    $region56: #{tpu_custom_call.1} parent=1 // pred_region
      %s388 = ssub.s32 128, 128
      %389 = vsyncadd [#allocation4], %s388
      %s391 = sshll.u32 [#allocation10], 4
      %s392 = int_to_ptr.vmem [resolvable:$true] %s391
      %394 = dma.vmem_to_hbm [thread:$0]  %s392, 128, %s9, [#allocation4]
    $region57: #{tpu_custom_call.1} parent=1 // pred_fallthru
      _
    // Predicated region
    $region58: #{tpu_custom_call.1} parent=1 // pred_check
      _
    $region59: #{tpu_custom_call.1} parent=1 // pred_check_branch
      %396 = sbr.rel (0) target = $region61
    $region60: #{tpu_custom_call.1} parent=1 // pred_region
      %397 = dma.done [#allocation4], 128
    $region61: #{tpu_custom_call.1} parent=1 // pred_fallthru
      _
    %398 = vsyncpa [#allocation3], 1
    %399 = vsyncpa [#allocation6], 1
    %400 = vsyncpa [#allocation9], 1
    %401 = vsyncpa [#allocation4], 1

</llo_original>
